<compile_context>
chip_gen: v7x
topology: tpu7x:2x2x1
jax: 0.10.0
libtpu: 0.0.40
codegen_flags: <defaults>
</compile_context>

<pallas_src>
import jax
import jax.numpy as jnp
from jax.experimental import pallas as pl
from jax.experimental.pallas import tpu as pltpu

VOCAB = 100
H_IN = 32
H = 32
N_OUT = 2
EMB_ROWS = 128   # embedding table zero-padded to one full lane group


def lstm_net_kernel(tok_ref, emb_ref, wx_ref, wh_ref, b_ref, fcw_ref, fcb_ref,
                    out_ref):
    """One-hot embedding gather + full LSTM recurrence + final linear.

    tok_ref : (T*B, 1)       int32  VMEM  time-major flattened token ids
    emb_ref : (128, H_IN)    bf16   VMEM  zero-padded embedding table
    wx_ref  : (H_IN, 4H)     bf16   VMEM  input->gate weights  [i | f | g | o]
    wh_ref  : (H, 4H)        bf16   VMEM  hidden->gate weights [i | f | g | o]
    b_ref   : (1, 4H)        f32    VMEM  gate biases
    fcw_ref : (H, N_OUT)     f32    VMEM  final linear weight
    fcb_ref : (1, N_OUT)     f32    VMEM  final linear bias
    out_ref : (B, N_OUT)     f32    VMEM  logits for the last time step
    """
    TB = tok_ref.shape[0]
    h = wh_ref.shape[0]
    B = out_ref.shape[0]
    T = TB // B

    # ---- 1. Embedding gather as ONE one-hot MXU matmul ---------------------
    # onehot is (T*B, 128) bf16; a single (16,128)x(128,32) dot replaces the
    # serialized dynamic-row copies.  Out-of-range ids yield a zero row.
    tok_col = tok_ref[...]                                        # (T*B, 1) i32
    lane_ids = jax.lax.broadcasted_iota(jnp.int32, (TB, EMB_ROWS), 1)
    onehot = (lane_ids == tok_col).astype(jnp.bfloat16)           # (T*B, 128)
    x_all = jnp.dot(onehot, emb_ref[...],
                    preferred_element_type=jnp.float32)           # (T*B, H_IN)
    x_all = x_all.astype(jnp.bfloat16)                            # exact (one-hot)

    # ---- 2. Hoisted input projection + bias: one batched MXU call ----------
    zx = jnp.dot(x_all, wx_ref[...],
                 preferred_element_type=jnp.float32) + b_ref[...]  # (T*B, 4H) f32

    wh_bf = wh_ref[...]                                            # (H, 4H) bf16

    # Hoisted gate scale: [1 | 1 | 2 | 1] over the four gate quarters, so one
    # sigmoid pass per step covers i/f/o AND (via tanh(x)=2*sigmoid(2x)-1) g.
    lane4h = jax.lax.broadcasted_iota(jnp.int32, (1, 4 * h), 1)
    gate_scale = jnp.where((lane4h >= 2 * h) & (lane4h < 3 * h),
                           jnp.float32(2.0), jnp.float32(1.0))     # (1, 4H) f32

    h_t = jnp.zeros((B, h), jnp.float32)
    c_t = jnp.zeros((B, h), jnp.float32)

    # ---- 3. Fully-unrolled recurrence (T static & tiny) --------------------
    # Only the serial h @ Wh matmul + 2 EUP passes remain on the per-step
    # critical path; gate/state math stays f32 (v5e-safe).
    for t in range(T):
        zx_t = zx[t * B:(t + 1) * B, :]                            # static slice
        z = zx_t + jnp.dot(h_t.astype(jnp.bfloat16), wh_bf,
                           preferred_element_type=jnp.float32)     # (B, 4H) f32
        s = jax.nn.sigmoid(z * gate_scale)                         # 1 EUP pass
        i_g = s[:, 0 * h:1 * h]
        f_g = s[:, 1 * h:2 * h]
        g_g = 2.0 * s[:, 2 * h:3 * h] - 1.0                        # tanh identity
        o_g = s[:, 3 * h:4 * h]
        c_t = f_g * c_t + i_g * g_g
        h_t = o_g * jnp.tanh(c_t)                                  # 1 EUP pass

    # ---- 4. Fused final Linear on the last hidden state --------------------
    # K=32, N=2: negligible cost, kept f32 to match the reference exactly.
    out_ref[...] = (
        jnp.dot(h_t, fcw_ref[...], preferred_element_type=jnp.float32)
        + fcb_ref[...]
    )


@jax.jit
def net_forward(tokens, params):
    """tokens: (B, T) int32 in [0, VOCAB]."""
    emb, wx, wh, b, fcw, fcb = params
    B, T = tokens.shape
    h_in = emb.shape[1]
    h4 = wh.shape[1]
    hid = wh.shape[0]
    n_out = fcw.shape[1]
    TB = T * B

    # Wrapper-side prep (fused into the jit, tiny):
    #  * zero-pad embedding table to 128 rows + cast to bf16
    #  * pre-cast matmul weights to bf16 (halves param DMA, no in-kernel casts)
    #  * time-major flatten the tokens so the one-hot rows line up with the
    #    hoisted (T*B, 4H) input projection.
    emb_bf = jnp.zeros((EMB_ROWS, h_in), jnp.bfloat16)
    emb_bf = emb_bf.at[:emb.shape[0]].set(emb.astype(jnp.bfloat16))
    wx_bf = wx.astype(jnp.bfloat16)
    wh_bf = wh.astype(jnp.bfloat16)
    tokens_tm = tokens.astype(jnp.int32).T.reshape(TB, 1)          # (T*B, 1)

    flops = (2 * TB * EMB_ROWS * h_in       # one-hot gather matmul
             + 2 * TB * h_in * h4           # hoisted input projection
             + 2 * TB * hid * h4            # recurrent h @ Wh
             + 2 * B * hid * n_out          # final linear
             + 10 * TB * h4)                # gate elementwise (rough)
    transcendentals = TB * (h4 + hid)       # 1 sigmoid(4H) + 1 tanh(H) per row
    bytes_accessed = (4 * tokens_tm.size + 2 * emb_bf.size + 2 * wx_bf.size
                      + 2 * wh_bf.size + 4 * b.size + 4 * fcw.size
                      + 4 * fcb.size + 4 * B * n_out)

    vmem = pl.BlockSpec(memory_space=pltpu.MemorySpace.VMEM)

    # Grid-less single invocation on purpose: the whole problem (~20 KB) lives
    # in VMEM; a grid/pipeline would only add per-step overhead here.
    out = pl.pallas_call(
        lstm_net_kernel,
        out_shape=jax.ShapeDtypeStruct((B, n_out), jnp.float32),
        in_specs=[vmem, vmem, vmem, vmem, vmem, vmem, vmem],
        out_specs=vmem,
        cost_estimate=pl.CostEstimate(
            flops=flops,
            transcendentals=transcendentals,
            bytes_accessed=bytes_accessed),
    )(tokens_tm, emb_bf, wx_bf, wh_bf, b, fcw, fcb)
    return out


def make_params(key):
    """Deterministic synthetic parameters matching the PyTorch shapes."""
    k_emb, k_wx, k_wh, k_b, k_fcw, k_fcb = jax.random.split(key, 6)
    stdv = 1.0 / jnp.sqrt(jnp.float32(H))
    emb = jax.random.normal(k_emb, (VOCAB + 1, H_IN), jnp.float32)          # nn.Embedding
    wx = jax.random.uniform(k_wx, (H_IN, 4 * H), jnp.float32, -stdv, stdv)  # U_i|U_f|U_c|U_o
    wh = jax.random.uniform(k_wh, (H, 4 * H), jnp.float32, -stdv, stdv)     # V_i|V_f|V_c|V_o
    b = jax.random.uniform(k_b, (1, 4 * H), jnp.float32, -stdv, stdv)       # b_i|b_f|b_c|b_o
    fcw = jax.random.uniform(k_fcw, (H, N_OUT), jnp.float32, -stdv, stdv)   # fc1.weight.T
    fcb = jax.random.uniform(k_fcb, (1, N_OUT), jnp.float32, -stdv, stdv)   # fc1.bias
    return (emb, wx, wh, b, fcw, fcb)


def reference_forward(tokens, params):
    """Pure-JAX reference mirroring the PyTorch forward.

    Applies the same bf16 operand rounding (f32 accumulation) as the kernel so
    the comparison stays tight.
    """
    emb, wx, wh, b, fcw, fcb = params
    x = emb[tokens]  # (B, T, H_IN)
    B, T, _ = x.shape
    bf = jnp.bfloat16
    wx_bf = wx.astype(bf)
    wh_bf = wh.astype(bf)
    h_t = jnp.zeros((B, H), jnp.float32)
    c_t = jnp.zeros((B, H), jnp.float32)
    for t in range(T):
        z = (jnp.dot(x[:, t, :].astype(bf), wx_bf,
                     preferred_element_type=jnp.float32)
             + jnp.dot(h_t.astype(bf), wh_bf,
                       preferred_element_type=jnp.float32)
             + b)
        i_g = jax.nn.sigmoid(z[:, 0 * H:1 * H])
        f_g = jax.nn.sigmoid(z[:, 1 * H:2 * H])
        g_g = jnp.tanh(z[:, 2 * H:3 * H])
        o_g = jax.nn.sigmoid(z[:, 3 * H:4 * H])
        c_t = f_g * c_t + i_g * g_g
        h_t = o_g * jnp.tanh(c_t)
    return jnp.dot(h_t, fcw, preferred_element_type=jnp.float32) + fcb


if __name__ == "__main__":
    key = jax.random.PRNGKey(0)
    k_tok, k_par = jax.random.split(key)

    B, T = 2, 8
    tokens = jax.random.randint(k_tok, (B, T), 0, VOCAB + 1, dtype=jnp.int32)
    params = make_params(k_par)

    out = net_forward(tokens, params)
    out = jax.block_until_ready(out)

    ref = reference_forward(tokens, params)
    assert out.shape == (B, N_OUT), out.shape
    assert jnp.allclose(out, ref, atol=1e-3, rtol=1e-3), (out, ref)

    print("KERNEL_OK")
</pallas_src>

<mosaic_0001>
module attributes {stable_mosaic.version = 11 : i64} {
  func.func @lstm_net_kernel(%arg0: memref<16x1xi32, #tpu.memory_space<vmem>>, %arg1: memref<128x32xbf16, #tpu.memory_space<vmem>>, %arg2: memref<32x128xbf16, #tpu.memory_space<vmem>>, %arg3: memref<32x128xbf16, #tpu.memory_space<vmem>>, %arg4: memref<1x128xf32, #tpu.memory_space<vmem>>, %arg5: memref<32x2xf32, #tpu.memory_space<vmem>>, %arg6: memref<1x2xf32, #tpu.memory_space<vmem>>, %arg7: memref<2x2xf32, #tpu.memory_space<vmem>>) attributes {dimension_semantics = [], scalar_prefetch = 0 : i64, scratch_operands = 0 : i64, tpu.core_type = #tpu.core_type<tc>} {
    %c0 = arith.constant 0 : index
    %c0_0 = arith.constant 0 : index
    %0 = vector.load %arg0[%c0, %c0_0] : memref<16x1xi32, #tpu.memory_space<vmem>>, vector<16x1xi32>
    %1 = tpu.iota {dimensions = array<i32: 1>} : vector<16x128xi32>
    %2 = vector.broadcast %0 : vector<16x1xi32> to vector<16x128xi32>
    %3 = arith.cmpi eq, %1, %2 : vector<16x128xi32>
    %4 = arith.extui %3 : vector<16x128xi1> to vector<16x128xi32>
    %5 = arith.sitofp %4 : vector<16x128xi32> to vector<16x128xf32>
    %6 = arith.truncf %5 : vector<16x128xf32> to vector<16x128xbf16>
    %c0_1 = arith.constant 0 : index
    %c0_2 = arith.constant 0 : index
    %7 = vector.load %arg1[%c0_1, %c0_2] : memref<128x32xbf16, #tpu.memory_space<vmem>>, vector<128x32xbf16>
    %cst = arith.constant dense<0.000000e+00> : vector<16x32xf32>
    %8 = tpu.matmul %6, %7, %cst {dimension_numbers = #tpu.dot_dimension_numbers<[1], [0], [0], [1], [0, 0, 1, 1], [], []>} : vector<16x128xbf16>, vector<128x32xbf16>, vector<16x32xf32> -> vector<16x32xf32>
    %9 = arith.truncf %8 : vector<16x32xf32> to vector<16x32xbf16>
    %c0_3 = arith.constant 0 : index
    %c0_4 = arith.constant 0 : index
    %10 = vector.load %arg2[%c0_3, %c0_4] : memref<32x128xbf16, #tpu.memory_space<vmem>>, vector<32x128xbf16>
    %cst_5 = arith.constant dense<0.000000e+00> : vector<16x128xf32>
    %11 = tpu.matmul %9, %10, %cst_5 {dimension_numbers = #tpu.dot_dimension_numbers<[1], [0], [0], [1], [0, 0, 1, 1], [], []>} : vector<16x32xbf16>, vector<32x128xbf16>, vector<16x128xf32> -> vector<16x128xf32>
    %c0_6 = arith.constant 0 : index
    %c0_7 = arith.constant 0 : index
    %12 = vector.load %arg4[%c0_6, %c0_7] : memref<1x128xf32, #tpu.memory_space<vmem>>, vector<1x128xf32>
    %13 = vector.broadcast %12 : vector<1x128xf32> to vector<16x128xf32>
    %14 = arith.addf %11, %13 : vector<16x128xf32>
    %c0_8 = arith.constant 0 : index
    %c0_9 = arith.constant 0 : index
    %15 = vector.load %arg3[%c0_8, %c0_9] : memref<32x128xbf16, #tpu.memory_space<vmem>>, vector<32x128xbf16>
    %16 = tpu.iota {dimensions = array<i32: 1>} : vector<1x128xi32>
    %c64_i32 = arith.constant 64 : i32
    %17 = vector.broadcast %c64_i32 : i32 to vector<1x128xi32>
    %18 = arith.cmpi sge, %16, %17 : vector<1x128xi32>
    %c96_i32 = arith.constant 96 : i32
    %19 = vector.broadcast %c96_i32 : i32 to vector<1x128xi32>
    %20 = arith.cmpi slt, %16, %19 : vector<1x128xi32>
    %21 = arith.andi %18, %20 : vector<1x128xi1>
    %cst_10 = arith.constant 2.000000e+00 : f32
    %cst_11 = arith.constant 1.000000e+00 : f32
    %22 = vector.broadcast %cst_10 : f32 to vector<1x128xf32>
    %23 = vector.broadcast %cst_11 : f32 to vector<1x128xf32>
    %24 = arith.select %21, %22, %23 : vector<1x128xi1>, vector<1x128xf32>
    %cst_12 = arith.constant 0.000000e+00 : f32
    %25 = vector.broadcast %cst_12 : f32 to vector<2x32xf32>
    %cst_13 = arith.constant 0.000000e+00 : f32
    %26 = vector.broadcast %cst_13 : f32 to vector<2x32xf32>
    %27 = vector.extract_strided_slice %14 {offsets = [0, 0], sizes = [2, 128], strides = [1, 1]} : vector<16x128xf32> to vector<2x128xf32>
    %28 = arith.truncf %25 : vector<2x32xf32> to vector<2x32xbf16>
    %cst_14 = arith.constant dense<0.000000e+00> : vector<2x128xf32>
    %29 = tpu.matmul %28, %15, %cst_14 {dimension_numbers = #tpu.dot_dimension_numbers<[1], [0], [0], [1], [0, 0, 1, 1], [], []>} : vector<2x32xbf16>, vector<32x128xbf16>, vector<2x128xf32> -> vector<2x128xf32>
    %30 = arith.addf %27, %29 : vector<2x128xf32>
    %31 = vector.broadcast %24 : vector<1x128xf32> to vector<2x128xf32>
    %32 = arith.mulf %30, %31 : vector<2x128xf32>
    %33 = arith.negf %32 : vector<2x128xf32>
    %34 = math.exp %33 : vector<2x128xf32>
    %cst_15 = arith.constant 1.000000e+00 : f32
    %35 = vector.broadcast %cst_15 : f32 to vector<2x128xf32>
    %36 = arith.addf %35, %34 : vector<2x128xf32>
    %37 = arith.divf %35, %36 : vector<2x128xf32>
    %38 = vector.extract_strided_slice %37 {offsets = [0, 0], sizes = [2, 32], strides = [1, 1]} : vector<2x128xf32> to vector<2x32xf32>
    %39 = vector.extract_strided_slice %37 {offsets = [0, 32], sizes = [2, 32], strides = [1, 1]} : vector<2x128xf32> to vector<2x32xf32>
    %40 = vector.extract_strided_slice %37 {offsets = [0, 64], sizes = [2, 32], strides = [1, 1]} : vector<2x128xf32> to vector<2x32xf32>
    %cst_16 = arith.constant 2.000000e+00 : f32
    %41 = vector.broadcast %cst_16 : f32 to vector<2x32xf32>
    %42 = arith.mulf %41, %40 : vector<2x32xf32>
    %cst_17 = arith.constant 1.000000e+00 : f32
    %43 = vector.broadcast %cst_17 : f32 to vector<2x32xf32>
    %44 = arith.subf %42, %43 : vector<2x32xf32>
    %45 = vector.extract_strided_slice %37 {offsets = [0, 96], sizes = [2, 32], strides = [1, 1]} : vector<2x128xf32> to vector<2x32xf32>
    %46 = arith.mulf %39, %26 : vector<2x32xf32>
    %47 = arith.mulf %38, %44 : vector<2x32xf32>
    %48 = arith.addf %46, %47 : vector<2x32xf32>
    %49 = math.tanh %48 : vector<2x32xf32>
    %50 = arith.mulf %45, %49 : vector<2x32xf32>
    %51 = vector.extract_strided_slice %14 {offsets = [2, 0], sizes = [2, 128], strides = [1, 1]} : vector<16x128xf32> to vector<2x128xf32>
    %52 = arith.truncf %50 : vector<2x32xf32> to vector<2x32xbf16>
    %cst_18 = arith.constant dense<0.000000e+00> : vector<2x128xf32>
    %53 = tpu.matmul %52, %15, %cst_18 {dimension_numbers = #tpu.dot_dimension_numbers<[1], [0], [0], [1], [0, 0, 1, 1], [], []>} : vector<2x32xbf16>, vector<32x128xbf16>, vector<2x128xf32> -> vector<2x128xf32>
    %54 = arith.addf %51, %53 : vector<2x128xf32>
    %55 = vector.broadcast %24 : vector<1x128xf32> to vector<2x128xf32>
    %56 = arith.mulf %54, %55 : vector<2x128xf32>
    %57 = arith.negf %56 : vector<2x128xf32>
    %58 = math.exp %57 : vector<2x128xf32>
    %cst_19 = arith.constant 1.000000e+00 : f32
    %59 = vector.broadcast %cst_19 : f32 to vector<2x128xf32>
    %60 = arith.addf %59, %58 : vector<2x128xf32>
    %61 = arith.divf %59, %60 : vector<2x128xf32>
    %62 = vector.extract_strided_slice %61 {offsets = [0, 0], sizes = [2, 32], strides = [1, 1]} : vector<2x128xf32> to vector<2x32xf32>
    %63 = vector.extract_strided_slice %61 {offsets = [0, 32], sizes = [2, 32], strides = [1, 1]} : vector<2x128xf32> to vector<2x32xf32>
    %64 = vector.extract_strided_slice %61 {offsets = [0, 64], sizes = [2, 32], strides = [1, 1]} : vector<2x128xf32> to vector<2x32xf32>
    %cst_20 = arith.constant 2.000000e+00 : f32
    %65 = vector.broadcast %cst_20 : f32 to vector<2x32xf32>
    %66 = arith.mulf %65, %64 : vector<2x32xf32>
    %cst_21 = arith.constant 1.000000e+00 : f32
    %67 = vector.broadcast %cst_21 : f32 to vector<2x32xf32>
    %68 = arith.subf %66, %67 : vector<2x32xf32>
    %69 = vector.extract_strided_slice %61 {offsets = [0, 96], sizes = [2, 32], strides = [1, 1]} : vector<2x128xf32> to vector<2x32xf32>
    %70 = arith.mulf %63, %48 : vector<2x32xf32>
    %71 = arith.mulf %62, %68 : vector<2x32xf32>
    %72 = arith.addf %70, %71 : vector<2x32xf32>
    %73 = math.tanh %72 : vector<2x32xf32>
    %74 = arith.mulf %69, %73 : vector<2x32xf32>
    %75 = vector.extract_strided_slice %14 {offsets = [4, 0], sizes = [2, 128], strides = [1, 1]} : vector<16x128xf32> to vector<2x128xf32>
    %76 = arith.truncf %74 : vector<2x32xf32> to vector<2x32xbf16>
    %cst_22 = arith.constant dense<0.000000e+00> : vector<2x128xf32>
    %77 = tpu.matmul %76, %15, %cst_22 {dimension_numbers = #tpu.dot_dimension_numbers<[1], [0], [0], [1], [0, 0, 1, 1], [], []>} : vector<2x32xbf16>, vector<32x128xbf16>, vector<2x128xf32> -> vector<2x128xf32>
    %78 = arith.addf %75, %77 : vector<2x128xf32>
    %79 = vector.broadcast %24 : vector<1x128xf32> to vector<2x128xf32>
    %80 = arith.mulf %78, %79 : vector<2x128xf32>
    %81 = arith.negf %80 : vector<2x128xf32>
    %82 = math.exp %81 : vector<2x128xf32>
    %cst_23 = arith.constant 1.000000e+00 : f32
    %83 = vector.broadcast %cst_23 : f32 to vector<2x128xf32>
    %84 = arith.addf %83, %82 : vector<2x128xf32>
    %85 = arith.divf %83, %84 : vector<2x128xf32>
    %86 = vector.extract_strided_slice %85 {offsets = [0, 0], sizes = [2, 32], strides = [1, 1]} : vector<2x128xf32> to vector<2x32xf32>
    %87 = vector.extract_strided_slice %85 {offsets = [0, 32], sizes = [2, 32], strides = [1, 1]} : vector<2x128xf32> to vector<2x32xf32>
    %88 = vector.extract_strided_slice %85 {offsets = [0, 64], sizes = [2, 32], strides = [1, 1]} : vector<2x128xf32> to vector<2x32xf32>
    %cst_24 = arith.constant 2.000000e+00 : f32
    %89 = vector.broadcast %cst_24 : f32 to vector<2x32xf32>
    %90 = arith.mulf %89, %88 : vector<2x32xf32>
    %cst_25 = arith.constant 1.000000e+00 : f32
    %91 = vector.broadcast %cst_25 : f32 to vector<2x32xf32>
    %92 = arith.subf %90, %91 : vector<2x32xf32>
    %93 = vector.extract_strided_slice %85 {offsets = [0, 96], sizes = [2, 32], strides = [1, 1]} : vector<2x128xf32> to vector<2x32xf32>
    %94 = arith.mulf %87, %72 : vector<2x32xf32>
    %95 = arith.mulf %86, %92 : vector<2x32xf32>
    %96 = arith.addf %94, %95 : vector<2x32xf32>
    %97 = math.tanh %96 : vector<2x32xf32>
    %98 = arith.mulf %93, %97 : vector<2x32xf32>
    %99 = vector.extract_strided_slice %14 {offsets = [6, 0], sizes = [2, 128], strides = [1, 1]} : vector<16x128xf32> to vector<2x128xf32>
    %100 = arith.truncf %98 : vector<2x32xf32> to vector<2x32xbf16>
    %cst_26 = arith.constant dense<0.000000e+00> : vector<2x128xf32>
    %101 = tpu.matmul %100, %15, %cst_26 {dimension_numbers = #tpu.dot_dimension_numbers<[1], [0], [0], [1], [0, 0, 1, 1], [], []>} : vector<2x32xbf16>, vector<32x128xbf16>, vector<2x128xf32> -> vector<2x128xf32>
    %102 = arith.addf %99, %101 : vector<2x128xf32>
    %103 = vector.broadcast %24 : vector<1x128xf32> to vector<2x128xf32>
    %104 = arith.mulf %102, %103 : vector<2x128xf32>
    %105 = arith.negf %104 : vector<2x128xf32>
    %106 = math.exp %105 : vector<2x128xf32>
    %cst_27 = arith.constant 1.000000e+00 : f32
    %107 = vector.broadcast %cst_27 : f32 to vector<2x128xf32>
    %108 = arith.addf %107, %106 : vector<2x128xf32>
    %109 = arith.divf %107, %108 : vector<2x128xf32>
    %110 = vector.extract_strided_slice %109 {offsets = [0, 0], sizes = [2, 32], strides = [1, 1]} : vector<2x128xf32> to vector<2x32xf32>
    %111 = vector.extract_strided_slice %109 {offsets = [0, 32], sizes = [2, 32], strides = [1, 1]} : vector<2x128xf32> to vector<2x32xf32>
    %112 = vector.extract_strided_slice %109 {offsets = [0, 64], sizes = [2, 32], strides = [1, 1]} : vector<2x128xf32> to vector<2x32xf32>
    %cst_28 = arith.constant 2.000000e+00 : f32
    %113 = vector.broadcast %cst_28 : f32 to vector<2x32xf32>
    %114 = arith.mulf %113, %112 : vector<2x32xf32>
    %cst_29 = arith.constant 1.000000e+00 : f32
    %115 = vector.broadcast %cst_29 : f32 to vector<2x32xf32>
    %116 = arith.subf %114, %115 : vector<2x32xf32>
    %117 = vector.extract_strided_slice %109 {offsets = [0, 96], sizes = [2, 32], strides = [1, 1]} : vector<2x128xf32> to vector<2x32xf32>
    %118 = arith.mulf %111, %96 : vector<2x32xf32>
    %119 = arith.mulf %110, %116 : vector<2x32xf32>
    %120 = arith.addf %118, %119 : vector<2x32xf32>
    %121 = math.tanh %120 : vector<2x32xf32>
    %122 = arith.mulf %117, %121 : vector<2x32xf32>
    %123 = vector.extract_strided_slice %14 {offsets = [8, 0], sizes = [2, 128], strides = [1, 1]} : vector<16x128xf32> to vector<2x128xf32>
    %124 = arith.truncf %122 : vector<2x32xf32> to vector<2x32xbf16>
    %cst_30 = arith.constant dense<0.000000e+00> : vector<2x128xf32>
    %125 = tpu.matmul %124, %15, %cst_30 {dimension_numbers = #tpu.dot_dimension_numbers<[1], [0], [0], [1], [0, 0, 1, 1], [], []>} : vector<2x32xbf16>, vector<32x128xbf16>, vector<2x128xf32> -> vector<2x128xf32>
    %126 = arith.addf %123, %125 : vector<2x128xf32>
    %127 = vector.broadcast %24 : vector<1x128xf32> to vector<2x128xf32>
    %128 = arith.mulf %126, %127 : vector<2x128xf32>
    %129 = arith.negf %128 : vector<2x128xf32>
    %130 = math.exp %129 : vector<2x128xf32>
    %cst_31 = arith.constant 1.000000e+00 : f32
    %131 = vector.broadcast %cst_31 : f32 to vector<2x128xf32>
    %132 = arith.addf %131, %130 : vector<2x128xf32>
    %133 = arith.divf %131, %132 : vector<2x128xf32>
    %134 = vector.extract_strided_slice %133 {offsets = [0, 0], sizes = [2, 32], strides = [1, 1]} : vector<2x128xf32> to vector<2x32xf32>
    %135 = vector.extract_strided_slice %133 {offsets = [0, 32], sizes = [2, 32], strides = [1, 1]} : vector<2x128xf32> to vector<2x32xf32>
    %136 = vector.extract_strided_slice %133 {offsets = [0, 64], sizes = [2, 32], strides = [1, 1]} : vector<2x128xf32> to vector<2x32xf32>
    %cst_32 = arith.constant 2.000000e+00 : f32
    %137 = vector.broadcast %cst_32 : f32 to vector<2x32xf32>
    %138 = arith.mulf %137, %136 : vector<2x32xf32>
    %cst_33 = arith.constant 1.000000e+00 : f32
    %139 = vector.broadcast %cst_33 : f32 to vector<2x32xf32>
    %140 = arith.subf %138, %139 : vector<2x32xf32>
    %141 = vector.extract_strided_slice %133 {offsets = [0, 96], sizes = [2, 32], strides = [1, 1]} : vector<2x128xf32> to vector<2x32xf32>
    %142 = arith.mulf %135, %120 : vector<2x32xf32>
    %143 = arith.mulf %134, %140 : vector<2x32xf32>
    %144 = arith.addf %142, %143 : vector<2x32xf32>
    %145 = math.tanh %144 : vector<2x32xf32>
    %146 = arith.mulf %141, %145 : vector<2x32xf32>
    %147 = vector.extract_strided_slice %14 {offsets = [10, 0], sizes = [2, 128], strides = [1, 1]} : vector<16x128xf32> to vector<2x128xf32>
    %148 = arith.truncf %146 : vector<2x32xf32> to vector<2x32xbf16>
    %cst_34 = arith.constant dense<0.000000e+00> : vector<2x128xf32>
    %149 = tpu.matmul %148, %15, %cst_34 {dimension_numbers = #tpu.dot_dimension_numbers<[1], [0], [0], [1], [0, 0, 1, 1], [], []>} : vector<2x32xbf16>, vector<32x128xbf16>, vector<2x128xf32> -> vector<2x128xf32>
    %150 = arith.addf %147, %149 : vector<2x128xf32>
    %151 = vector.broadcast %24 : vector<1x128xf32> to vector<2x128xf32>
    %152 = arith.mulf %150, %151 : vector<2x128xf32>
    %153 = arith.negf %152 : vector<2x128xf32>
    %154 = math.exp %153 : vector<2x128xf32>
    %cst_35 = arith.constant 1.000000e+00 : f32
    %155 = vector.broadcast %cst_35 : f32 to vector<2x128xf32>
    %156 = arith.addf %155, %154 : vector<2x128xf32>
    %157 = arith.divf %155, %156 : vector<2x128xf32>
    %158 = vector.extract_strided_slice %157 {offsets = [0, 0], sizes = [2, 32], strides = [1, 1]} : vector<2x128xf32> to vector<2x32xf32>
    %159 = vector.extract_strided_slice %157 {offsets = [0, 32], sizes = [2, 32], strides = [1, 1]} : vector<2x128xf32> to vector<2x32xf32>
    %160 = vector.extract_strided_slice %157 {offsets = [0, 64], sizes = [2, 32], strides = [1, 1]} : vector<2x128xf32> to vector<2x32xf32>
    %cst_36 = arith.constant 2.000000e+00 : f32
    %161 = vector.broadcast %cst_36 : f32 to vector<2x32xf32>
    %162 = arith.mulf %161, %160 : vector<2x32xf32>
    %cst_37 = arith.constant 1.000000e+00 : f32
    %163 = vector.broadcast %cst_37 : f32 to vector<2x32xf32>
    %164 = arith.subf %162, %163 : vector<2x32xf32>
    %165 = vector.extract_strided_slice %157 {offsets = [0, 96], sizes = [2, 32], strides = [1, 1]} : vector<2x128xf32> to vector<2x32xf32>
    %166 = arith.mulf %159, %144 : vector<2x32xf32>
    %167 = arith.mulf %158, %164 : vector<2x32xf32>
    %168 = arith.addf %166, %167 : vector<2x32xf32>
    %169 = math.tanh %168 : vector<2x32xf32>
    %170 = arith.mulf %165, %169 : vector<2x32xf32>
    %171 = vector.extract_strided_slice %14 {offsets = [12, 0], sizes = [2, 128], strides = [1, 1]} : vector<16x128xf32> to vector<2x128xf32>
    %172 = arith.truncf %170 : vector<2x32xf32> to vector<2x32xbf16>
    %cst_38 = arith.constant dense<0.000000e+00> : vector<2x128xf32>
    %173 = tpu.matmul %172, %15, %cst_38 {dimension_numbers = #tpu.dot_dimension_numbers<[1], [0], [0], [1], [0, 0, 1, 1], [], []>} : vector<2x32xbf16>, vector<32x128xbf16>, vector<2x128xf32> -> vector<2x128xf32>
    %174 = arith.addf %171, %173 : vector<2x128xf32>
    %175 = vector.broadcast %24 : vector<1x128xf32> to vector<2x128xf32>
    %176 = arith.mulf %174, %175 : vector<2x128xf32>
    %177 = arith.negf %176 : vector<2x128xf32>
    %178 = math.exp %177 : vector<2x128xf32>
    %cst_39 = arith.constant 1.000000e+00 : f32
    %179 = vector.broadcast %cst_39 : f32 to vector<2x128xf32>
    %180 = arith.addf %179, %178 : vector<2x128xf32>
    %181 = arith.divf %179, %180 : vector<2x128xf32>
    %182 = vector.extract_strided_slice %181 {offsets = [0, 0], sizes = [2, 32], strides = [1, 1]} : vector<2x128xf32> to vector<2x32xf32>
    %183 = vector.extract_strided_slice %181 {offsets = [0, 32], sizes = [2, 32], strides = [1, 1]} : vector<2x128xf32> to vector<2x32xf32>
    %184 = vector.extract_strided_slice %181 {offsets = [0, 64], sizes = [2, 32], strides = [1, 1]} : vector<2x128xf32> to vector<2x32xf32>
    %cst_40 = arith.constant 2.000000e+00 : f32
    %185 = vector.broadcast %cst_40 : f32 to vector<2x32xf32>
    %186 = arith.mulf %185, %184 : vector<2x32xf32>
    %cst_41 = arith.constant 1.000000e+00 : f32
    %187 = vector.broadcast %cst_41 : f32 to vector<2x32xf32>
    %188 = arith.subf %186, %187 : vector<2x32xf32>
    %189 = vector.extract_strided_slice %181 {offsets = [0, 96], sizes = [2, 32], strides = [1, 1]} : vector<2x128xf32> to vector<2x32xf32>
    %190 = arith.mulf %183, %168 : vector<2x32xf32>
    %191 = arith.mulf %182, %188 : vector<2x32xf32>
    %192 = arith.addf %190, %191 : vector<2x32xf32>
    %193 = math.tanh %192 : vector<2x32xf32>
    %194 = arith.mulf %189, %193 : vector<2x32xf32>
    %195 = vector.extract_strided_slice %14 {offsets = [14, 0], sizes = [2, 128], strides = [1, 1]} : vector<16x128xf32> to vector<2x128xf32>
    %196 = arith.truncf %194 : vector<2x32xf32> to vector<2x32xbf16>
    %cst_42 = arith.constant dense<0.000000e+00> : vector<2x128xf32>
    %197 = tpu.matmul %196, %15, %cst_42 {dimension_numbers = #tpu.dot_dimension_numbers<[1], [0], [0], [1], [0, 0, 1, 1], [], []>} : vector<2x32xbf16>, vector<32x128xbf16>, vector<2x128xf32> -> vector<2x128xf32>
    %198 = arith.addf %195, %197 : vector<2x128xf32>
    %199 = vector.broadcast %24 : vector<1x128xf32> to vector<2x128xf32>
    %200 = arith.mulf %198, %199 : vector<2x128xf32>
    %201 = arith.negf %200 : vector<2x128xf32>
    %202 = math.exp %201 : vector<2x128xf32>
    %cst_43 = arith.constant 1.000000e+00 : f32
    %203 = vector.broadcast %cst_43 : f32 to vector<2x128xf32>
    %204 = arith.addf %203, %202 : vector<2x128xf32>
    %205 = arith.divf %203, %204 : vector<2x128xf32>
    %206 = vector.extract_strided_slice %205 {offsets = [0, 0], sizes = [2, 32], strides = [1, 1]} : vector<2x128xf32> to vector<2x32xf32>
    %207 = vector.extract_strided_slice %205 {offsets = [0, 32], sizes = [2, 32], strides = [1, 1]} : vector<2x128xf32> to vector<2x32xf32>
    %208 = vector.extract_strided_slice %205 {offsets = [0, 64], sizes = [2, 32], strides = [1, 1]} : vector<2x128xf32> to vector<2x32xf32>
    %cst_44 = arith.constant 2.000000e+00 : f32
    %209 = vector.broadcast %cst_44 : f32 to vector<2x32xf32>
    %210 = arith.mulf %209, %208 : vector<2x32xf32>
    %cst_45 = arith.constant 1.000000e+00 : f32
    %211 = vector.broadcast %cst_45 : f32 to vector<2x32xf32>
    %212 = arith.subf %210, %211 : vector<2x32xf32>
    %213 = vector.extract_strided_slice %205 {offsets = [0, 96], sizes = [2, 32], strides = [1, 1]} : vector<2x128xf32> to vector<2x32xf32>
    %214 = arith.mulf %207, %192 : vector<2x32xf32>
    %215 = arith.mulf %206, %212 : vector<2x32xf32>
    %216 = arith.addf %214, %215 : vector<2x32xf32>
    %217 = math.tanh %216 : vector<2x32xf32>
    %218 = arith.mulf %213, %217 : vector<2x32xf32>
    %c0_46 = arith.constant 0 : index
    %c0_47 = arith.constant 0 : index
    %219 = vector.load %arg5[%c0_46, %c0_47] : memref<32x2xf32, #tpu.memory_space<vmem>>, vector<32x2xf32>
    %cst_48 = arith.constant dense<0.000000e+00> : vector<2x2xf32>
    %220 = tpu.matmul %218, %219, %cst_48 {dimension_numbers = #tpu.dot_dimension_numbers<[1], [0], [0], [1], [0, 0, 1, 1], [], []>} : vector<2x32xf32>, vector<32x2xf32>, vector<2x2xf32> -> vector<2x2xf32>
    %c0_49 = arith.constant 0 : index
    %c0_50 = arith.constant 0 : index
    %221 = vector.load %arg6[%c0_49, %c0_50] : memref<1x2xf32, #tpu.memory_space<vmem>>, vector<1x2xf32>
    %222 = vector.broadcast %221 : vector<1x2xf32> to vector<2x2xf32>
    %223 = arith.addf %220, %222 : vector<2x2xf32>
    %c0_51 = arith.constant 0 : index
    %c0_52 = arith.constant 0 : index
    %224 = vector.load %arg7[%c0_51, %c0_52] : memref<2x2xf32, #tpu.memory_space<vmem>>, vector<2x2xf32>
    tpu.vector_store %arg7[%c0_51, %c0_52], %223 {strides = array<i32>} : memref<2x2xf32, #tpu.memory_space<vmem>>, vector<2x2xf32>,
    return
  }
}

</mosaic_0001>

<llo_original>
// kernel: net_forward.1
$region0: #{net_forward.1}
  #allocation0 [shape = 'u32[]', space=smem, size = 0x4, offset = 0x4, fixed_abs, tag = 'smem constant byte address 0x4 - core index']
  #allocation1 [shape = 'u32[144,128]{1,0:T(1,128)}', space=vmem, size = 0x12000, scoped, tag = 'internal scratch']
  %s0 = inlined_call_operand.vmem [shape: s32[16,1], index: 0, kind: input, shape index: {}]
  %s1 = inlined_call_operand.vmem [shape: bf16[128,32], index: 1, kind: input, shape index: {}]
  %s2 = inlined_call_operand.vmem [shape: bf16[32,128], index: 2, kind: input, shape index: {}]
  %s3 = inlined_call_operand.vmem [shape: bf16[32,128], index: 3, kind: input, shape index: {}]
  %s4 = inlined_call_operand.vmem [shape: f32[1,128], index: 4, kind: input, shape index: {}]
  %s5 = inlined_call_operand.vmem [shape: f32[32,2], index: 5, kind: input, shape index: {}]
  %s6 = inlined_call_operand.vmem [shape: f32[1,2], index: 6, kind: input, shape index: {}]
  %s7 = inlined_call_operand.hbm [shape: f32[2,2], index: 7, kind: output, shape index: {}]
  %s8 = sld [smem:[#allocation0]]
  $region38: #{net_forward.1} parent=0
    _
  %s10 = ssub.s32 1, %s8
  %s11 = scalar_select 0, %s10, %s8
  $region1: #{net_forward.1} parent=0
    #allocation2 [shape = 'u8[1024]{0}', space=vmem, size = 0x400, scoped, tag = 'output window, operand 0, single buffered']
    #allocation3 [shape = 's32[1]{0}', space=sflag, size = 0x4, scoped, tag = 'scoped memory for net_forward.1']
    %12 = vsyncpa [#allocation3], 0
    // Predicated region
    $region2: #{net_forward.1} parent=1 // pred_check
      _
    $region3: #{net_forward.1} parent=1 // pred_check_branch
      %14 = sbr.rel (0) target = $region5
    $region4: #{net_forward.1} parent=1 // pred_region
      _
    $region5: #{net_forward.1} parent=1 // pred_fallthru
      _
    // Predicated region
    $region6: #{net_forward.1} parent=1 // pred_check
      _
    $region7: #{net_forward.1} parent=1 // pred_check_branch
      %16 = sbr.rel (0) target = $region9
    $region8: #{net_forward.1} parent=1 // pred_region
      _
    $region9: #{net_forward.1} parent=1 // pred_fallthru
      _
    // Predicated region
    $region10: #{net_forward.1} parent=1 // pred_check
      _
    $region11: #{net_forward.1} parent=1 // pred_check_branch
      %18 = sbr.rel (0) target = $region13
    $region12: #{net_forward.1} parent=1 // pred_region
      _
    $region13: #{net_forward.1} parent=1 // pred_fallthru
      _
    // Predicated region
    $region14: #{net_forward.1} parent=1 // pred_check
      _
    $region15: #{net_forward.1} parent=1 // pred_check_branch
      %20 = sbr.rel (0) target = $region17
    $region16: #{net_forward.1} parent=1 // pred_region
      _
    $region17: #{net_forward.1} parent=1 // pred_fallthru
      _
    // Predicated region
    $region18: #{net_forward.1} parent=1 // pred_check
      _
    $region19: #{net_forward.1} parent=1 // pred_check_branch
      %22 = sbr.rel (0) target = $region21
    $region20: #{net_forward.1} parent=1 // pred_region
      _
    $region21: #{net_forward.1} parent=1 // pred_fallthru
      _
    // Predicated region
    $region22: #{net_forward.1} parent=1 // pred_check
      _
    $region23: #{net_forward.1} parent=1 // pred_check_branch
      %24 = sbr.rel (0) target = $region25
    $region24: #{net_forward.1} parent=1 // pred_region
      _
    $region25: #{net_forward.1} parent=1 // pred_fallthru
      _
    // Predicated region
    $region26: #{net_forward.1} parent=1 // pred_check
      _
    $region27: #{net_forward.1} parent=1 // pred_check_branch
      %26 = sbr.rel (0) target = $region29
    $region28: #{net_forward.1} parent=1 // pred_region
      _
    $region29: #{net_forward.1} parent=1 // pred_fallthru
      _
    %v28 = vld [vmem:[%s0] sm:$0xff]
    %v29 = vld [vmem:[%s0 + $0x8] sm:$0xff]
    %v30 = vlaneseq
    %v31 = vand.u32 %v30, 127
    %32 = vset.pattern.permute.xlu0 0
    %33 = vperm.xlu0 %32, %v28
    %v34 = vpop.permute.xlu0 %33
    %35 = vset.pattern.permute.xlu0 0
    %36 = vperm.xlu0 %35, %v29
    %v37 = vpop.permute.xlu0 %36
    %vm38 = vcmp.eq.s32.totalorder %v31, %v34
    %vm39 = vcmp.eq.s32.totalorder %v31, %v37
    %v40 = vsel %vm38, 1, 0
    %v41 = vsel %vm39, 1, 0
    %v42 = vcvt.s32.f32 %v40
    %v43 = vcvt.s32.f32 %v41
    %v44 = vpack.c.bf16 %v43, %v42
    %v45 = vld [vmem:[%s1] sm:$0xf]
    %v46 = vld [vmem:[%s1 + $0x4] sm:$0xf]
    %v47 = vld [vmem:[%s1 + $0x8] sm:$0xf]
    %v48 = vld [vmem:[%s1 + $0xc] sm:$0xf]
    %v49 = vld [vmem:[%s1 + $0x10] sm:$0xf]
    %v50 = vld [vmem:[%s1 + $0x14] sm:$0xf]
    %v51 = vld [vmem:[%s1 + $0x18] sm:$0xf]
    %v52 = vld [vmem:[%s1 + $0x1c] sm:$0xf]
    %v53 = vld [vmem:[%s1 + $0x20] sm:$0xf]
    %v54 = vld [vmem:[%s1 + $0x24] sm:$0xf]
    %v55 = vld [vmem:[%s1 + $0x28] sm:$0xf]
    %v56 = vld [vmem:[%s1 + $0x2c] sm:$0xf]
    %v57 = vld [vmem:[%s1 + $0x30] sm:$0xf]
    %v58 = vld [vmem:[%s1 + $0x34] sm:$0xf]
    %v59 = vld [vmem:[%s1 + $0x38] sm:$0xf]
    %v60 = vld [vmem:[%s1 + $0x3c] sm:$0xf]
    %v77 = vunpack.c.l.b16 %v45
    %v78 = vunpack.c.l.b16 %v46
    %v79 = vunpack.c.l.b16 %v47
    %v80 = vunpack.c.l.b16 %v48
    %v81 = vunpack.c.l.b16 %v49
    %v82 = vunpack.c.l.b16 %v50
    %v83 = vunpack.c.l.b16 %v51
    %v84 = vunpack.c.l.b16 %v52
    %v85 = vunpack.c.l.b16 %v53
    %v86 = vunpack.c.l.b16 %v54
    %v87 = vunpack.c.l.b16 %v55
    %v88 = vunpack.c.l.b16 %v56
    %v89 = vunpack.c.l.b16 %v57
    %v90 = vunpack.c.l.b16 %v58
    %v91 = vunpack.c.l.b16 %v59
    %v92 = vunpack.c.l.b16 %v60
    %v93 = vpack.c.b16 %v78, %v77
    %v94 = vpack.c.b16 %v80, %v79
    %v95 = vpack.c.b16 %v82, %v81
    %v96 = vpack.c.b16 %v84, %v83
    %v97 = vpack.c.b16 %v86, %v85
    %v98 = vpack.c.b16 %v88, %v87
    %v99 = vpack.c.b16 %v90, %v89
    %v100 = vpack.c.b16 %v92, %v91
    %109 = vmatprep.subr.bf16.mxu0 0
    %110 = vmatpush1.bf16.msra.mxu0 %v93
    %111 = vmatprep.subr.bf16.mxu0 0
    %112 = vmatpush1.bf16.msra.mxu0 %v94
    %113 = vmatprep.subr.bf16.mxu0 0
    %114 = vmatpush1.bf16.msra.mxu0 %v95
    %115 = vmatprep.subr.bf16.mxu0 0
    %116 = vmatpush1.bf16.msra.mxu0 %v96
    %117 = vmatprep.subr.bf16.mxu0 0
    %118 = vmatpush1.bf16.msra.mxu0 %v97
    %119 = vmatprep.subr.bf16.mxu0 0
    %120 = vmatpush1.bf16.msra.mxu0 %v98
    %121 = vmatprep.subr.bf16.mxu0 0
    %122 = vmatpush1.bf16.msra.mxu0 %v99
    %123 = vmatprep.subr.bf16.mxu0 0
    %124 = vmatpush1.bf16.msra.mxu0 %v100
    %125 = vmatprep.subr.bf16.mxu0 0
    %126 = vmatpush1.bf16.msra.mxu0 0
    %127 = vmatprep.subr.bf16.mxu0 0
    %128 = vmatpush1.bf16.msra.mxu0 0
    %129 = vmatprep.subr.bf16.mxu0 0
    %130 = vmatpush1.bf16.msra.mxu0 0
    %131 = vmatprep.subr.bf16.mxu0 0
    %132 = vmatpush1.bf16.msra.mxu0 0
    %133 = vmatprep.subr.bf16.mxu0 0
    %134 = vmatpush1.bf16.msra.mxu0 0
    %135 = vmatprep.subr.bf16.mxu0 0
    %136 = vmatpush1.bf16.msra.mxu0 0
    %137 = vmatprep.subr.bf16.mxu0 0
    %138 = vmatpush1.bf16.msra.mxu0 0
    %139 = vmatprep.subr.bf16.mxu0 0
    %140 = vmatpush1.bf16.msra.mxu0 0
    %141 = vmatprep.mubr.bf16.mxu0 0
    %142 = vmatmul.mubr.bf16.gmra.mrb[0].mxu0 %v44
    %v143 = vpop.f32.mrb[0].mxu0
    %v144 = vadd.f32 0.0, %v143
    %v145 = vpop.f32.mrb[0].mxu0
    %v146 = vpop.f32.mrb[0].mxu0
    %v147 = vadd.f32 0.0, %v146
    %v148 = vpop.f32.mrb[0].mxu0
    %149 = vdwg.mxu0
    %v150 = vpack.c.bf16 %v147, %v144
    %v151 = vld [vmem:[%s2] sm:$0xf]
    %v152 = vld [vmem:[%s2 + $0x4] sm:$0xf]
    %v153 = vld [vmem:[%s2 + $0x8] sm:$0xf]
    %v154 = vld [vmem:[%s2 + $0xc] sm:$0xf]
    %v155 = vld [vmem:[%s4] sm:$0x1]
    %v157 = vlaneseq
    %v158 = vshrl.u32 %v157, 7
    %v159 = vsub.s32 0, %v158
    %v160 = vrot.slane %v155, %v159
    %v166 = vunpack.c.l.b16 %v151
    %v167 = vunpack.c.l.b16 %v152
    %v168 = vunpack.c.l.b16 %v153
    %v169 = vunpack.c.l.b16 %v154
    %v170 = vpack.c.b16 %v167, %v166
    %v171 = vpack.c.b16 %v169, %v168
    %vm174 = vcmask 261120
    %v176 = vsel %vm174, %v150, 0
    %178 = vmatprep.subr.bf16.mxu0 0
    %179 = vmatpush1.bf16.msra.mxu0 %v170
    %180 = vmatprep.subr.bf16.mxu0 0
    %181 = vmatpush1.bf16.msra.mxu0 %v171
    %182 = vmatprep.subr.bf16.mxu0 0
    %183 = vmatpush1.bf16.msra.mxu0 0
    %184 = vmatprep.subr.bf16.mxu0 0
    %185 = vmatpush1.bf16.msra.mxu0 0
    %186 = vmatprep.subr.bf16.mxu0 0
    %187 = vmatpush1.bf16.msra.mxu0 0
    %188 = vmatprep.subr.bf16.mxu0 0
    %189 = vmatpush1.bf16.msra.mxu0 0
    %190 = vmatprep.subr.bf16.mxu0 0
    %191 = vmatpush1.bf16.msra.mxu0 0
    %192 = vmatprep.subr.bf16.mxu0 0
    %193 = vmatpush1.bf16.msra.mxu0 0
    %194 = vmatprep.subr.bf16.mxu0 0
    %195 = vmatpush1.bf16.msra.mxu0 0
    %196 = vmatprep.subr.bf16.mxu0 0
    %197 = vmatpush1.bf16.msra.mxu0 0
    %198 = vmatprep.subr.bf16.mxu0 0
    %199 = vmatpush1.bf16.msra.mxu0 0
    %200 = vmatprep.subr.bf16.mxu0 0
    %201 = vmatpush1.bf16.msra.mxu0 0
    %202 = vmatprep.subr.bf16.mxu0 0
    %203 = vmatpush1.bf16.msra.mxu0 0
    %204 = vmatprep.subr.bf16.mxu0 0
    %205 = vmatpush1.bf16.msra.mxu0 0
    %206 = vmatprep.subr.bf16.mxu0 0
    %207 = vmatpush1.bf16.msra.mxu0 0
    %208 = vmatprep.subr.bf16.mxu0 0
    %209 = vmatpush1.bf16.msra.mxu0 0
    %210 = vmatprep.mubr.bf16.mxu0 0
    %211 = vmatmul.mubr.bf16.gmra.mrb[0].mxu0 %v176
    %v212 = vpop.f32.mrb[0].mxu0
    %v213 = vadd.f32 %v160, %v212
    %v214 = vpop.f32.mrb[0].mxu0
    %v215 = vpop.f32.mrb[0].mxu0
    %v216 = vadd.f32 %v160, %v215
    %v217 = vpop.f32.mrb[0].mxu0
    %218 = vdwg.mxu0
    %v219 = vld [vmem:[%s3] sm:$0xf]
    %v220 = vld [vmem:[%s3 + $0x4] sm:$0xf]
    %v221 = vld [vmem:[%s3 + $0x8] sm:$0xf]
    %v222 = vld [vmem:[%s3 + $0xc] sm:$0xf]
    %vm223 = vcmp.ge.s32.totalorder %v31, 64
    %vm224 = vcmp.lt.s32.totalorder %v31, 96
    %vm225 = vmand %vm223, %vm224
    %v226 = vsel %vm225, 2.0, 1.0
    %v231 = vunpack.c.l.b16 %v219
    %v232 = vunpack.c.l.b16 %v220
    %v233 = vunpack.c.l.b16 %v221
    %v234 = vunpack.c.l.b16 %v222
    %v235 = vpack.c.b16 %v232, %v231
    %v236 = vpack.c.b16 %v234, %v233
    %v240 = vsel %vm174, 0, 0
    %242 = vmatprep.subr.bf16.mxu0 0
    %243 = vmatpush1.bf16.msra.mxu0 %v235
    %244 = vmatprep.subr.bf16.mxu0 0
    %245 = vmatpush1.bf16.msra.mxu0 %v236
    %246 = vmatprep.subr.bf16.mxu0 0
    %247 = vmatpush1.bf16.msra.mxu0 0
    %248 = vmatprep.subr.bf16.mxu0 0
    %249 = vmatpush1.bf16.msra.mxu0 0
    %250 = vmatprep.subr.bf16.mxu0 0
    %251 = vmatpush1.bf16.msra.mxu0 0
    %252 = vmatprep.subr.bf16.mxu0 0
    %253 = vmatpush1.bf16.msra.mxu0 0
    %254 = vmatprep.subr.bf16.mxu0 0
    %255 = vmatpush1.bf16.msra.mxu0 0
    %256 = vmatprep.subr.bf16.mxu0 0
    %257 = vmatpush1.bf16.msra.mxu0 0
    %258 = vmatprep.subr.bf16.mxu0 0
    %259 = vmatpush1.bf16.msra.mxu0 0
    %260 = vmatprep.subr.bf16.mxu0 0
    %261 = vmatpush1.bf16.msra.mxu0 0
    %262 = vmatprep.subr.bf16.mxu0 0
    %263 = vmatpush1.bf16.msra.mxu0 0
    %264 = vmatprep.subr.bf16.mxu0 0
    %265 = vmatpush1.bf16.msra.mxu0 0
    %266 = vmatprep.subr.bf16.mxu0 0
    %267 = vmatpush1.bf16.msra.mxu0 0
    %268 = vmatprep.subr.bf16.mxu0 0
    %269 = vmatpush1.bf16.msra.mxu0 0
    %270 = vmatprep.subr.bf16.mxu0 0
    %271 = vmatpush1.bf16.msra.mxu0 0
    %272 = vmatprep.subr.bf16.mxu0 0
    %273 = vmatpush1.bf16.msra.mxu0 0
    %274 = vmatprep.mubr.bf16.mxu0 0
    %275 = vmatmul.mubr.bf16.gmra.mrb[0].mxu0 %v240
    %v276 = vpop.f32.mrb[0].mxu0
    %v277 = vadd.f32 0.0, %v276
    %v278 = vpop.f32.mrb[0].mxu0
    %v279 = vpop.f32.mrb[0].mxu0
    %v280 = vpop.f32.mrb[0].mxu0
    %281 = vdwg.mxu0
    %v282 = vadd.f32 %v213, %v277
    %v283 = vmul.f32 %v282, %v226
    %v284 = vxor.u32 %v283, 2147483648
    %v285 = vmul.f32 %v284, 1.442695
    %v286 = vpow.pop %v285
    %v287 = vadd.f32 %v286, 1.0
    %v288 = vrcp.pop %v287
    %v289 = vmul.f32 1.0, %v288
    %v290 = vmul.f32 %v289, 2.0
    %v291 = vsub.f32 %v290, 1.0
    %v292 = vmul.f32 %v289, 0.0
    %294 = vrot.lane.b32.xlu0 %v291, 64
    %v295 = vpop.permute.xlu0 %294
    %v297 = vmul.f32 %v289, %v295
    %299 = vrot.lane.b32.xlu0 %v297, 32
    %v300 = vpop.permute.xlu0 %299
    %v302 = vadd.f32 %v292, %v300
    %v303 = vtanh.pop %v302
    %305 = vrot.lane.b32.xlu0 %v303, 64
    %v306 = vpop.permute.xlu0 %305
    %v308 = vmul.f32 %v289, %v306
    %v309 = vpack.c.bf16 %v308, %v308
    %311 = vrot.lane.b32.xlu0 %v309, 32
    %v312 = vpop.permute.xlu0 %311
    %v314 = vsel %vm174, %v312, 0
    %316 = vmatprep.subr.bf16.mxu0 0
    %317 = vmatpush1.bf16.msra.mxu0 %v235
    %318 = vmatprep.subr.bf16.mxu0 0
    %319 = vmatpush1.bf16.msra.mxu0 %v236
    %320 = vmatprep.subr.bf16.mxu0 0
    %321 = vmatpush1.bf16.msra.mxu0 0
    %322 = vmatprep.subr.bf16.mxu0 0
    %323 = vmatpush1.bf16.msra.mxu0 0
    %324 = vmatprep.subr.bf16.mxu0 0
    %325 = vmatpush1.bf16.msra.mxu0 0
    %326 = vmatprep.subr.bf16.mxu0 0
    %327 = vmatpush1.bf16.msra.mxu0 0
    %328 = vmatprep.subr.bf16.mxu0 0
    %329 = vmatpush1.bf16.msra.mxu0 0
    %330 = vmatprep.subr.bf16.mxu0 0
    %331 = vmatpush1.bf16.msra.mxu0 0
    %332 = vmatprep.subr.bf16.mxu0 0
    %333 = vmatpush1.bf16.msra.mxu0 0
    %334 = vmatprep.subr.bf16.mxu0 0
    %335 = vmatpush1.bf16.msra.mxu0 0
    %336 = vmatprep.subr.bf16.mxu0 0
    %337 = vmatpush1.bf16.msra.mxu0 0
    %338 = vmatprep.subr.bf16.mxu0 0
    %339 = vmatpush1.bf16.msra.mxu0 0
    %340 = vmatprep.subr.bf16.mxu0 0
    %341 = vmatpush1.bf16.msra.mxu0 0
    %342 = vmatprep.subr.bf16.mxu0 0
    %343 = vmatpush1.bf16.msra.mxu0 0
    %344 = vmatprep.subr.bf16.mxu0 0
    %345 = vmatpush1.bf16.msra.mxu0 0
    %346 = vmatprep.subr.bf16.mxu0 0
    %347 = vmatpush1.bf16.msra.mxu0 0
    %348 = vmatprep.mubr.bf16.mxu0 0
    %349 = vmatmul.mubr.bf16.gmra.mrb[0].mxu0 %v314
    %v350 = vpop.f32.mrb[0].mxu0
    %v351 = vadd.f32 0.0, %v350
    %v352 = vpop.f32.mrb[0].mxu0
    %v353 = vpop.f32.mrb[0].mxu0
    %v354 = vpop.f32.mrb[0].mxu0
    %355 = vdwg.mxu0
    %v357 = vrot.slane %v351, 6
    %v359 = vadd.f32 %v213, %v357
    %v360 = vmul.f32 %v359, %v226
    %v361 = vxor.u32 %v360, 2147483648
    %v362 = vmul.f32 %v361, 1.442695
    %v363 = vpow.pop %v362
    %v364 = vadd.f32 %v363, 1.0
    %v365 = vrcp.pop %v364
    %v366 = vmul.f32 1.0, %v365
    %v367 = vmul.f32 %v366, 2.0
    %v368 = vsub.f32 %v367, 1.0
    %v370 = vrot.slane %v302, 6
    %v372 = vmul.f32 %v366, %v370
    %374 = vrot.lane.b32.xlu0 %v368, 64
    %v375 = vpop.permute.xlu0 %374
    %v377 = vmul.f32 %v366, %v375
    %379 = vrot.lane.b32.xlu0 %v377, 32
    %v380 = vpop.permute.xlu0 %379
    %v382 = vadd.f32 %v372, %v380
    %v383 = vtanh.pop %v382
    %385 = vrot.lane.b32.xlu0 %v383, 64
    %v386 = vpop.permute.xlu0 %385
    %v388 = vmul.f32 %v366, %v386
    %v389 = vpack.c.bf16 %v388, %v388
    %v391 = vrot.slane %v389, 1
    %392 = vrot.lane.b32.xlu0 %v391, 32
    %v393 = vpop.permute.xlu0 %392
    %v395 = vsel %vm174, %v393, 0
    %397 = vmatprep.subr.bf16.mxu0 0
    %398 = vmatpush1.bf16.msra.mxu0 %v235
    %399 = vmatprep.subr.bf16.mxu0 0
    %400 = vmatpush1.bf16.msra.mxu0 %v236
    %401 = vmatprep.subr.bf16.mxu0 0
    %402 = vmatpush1.bf16.msra.mxu0 0
    %403 = vmatprep.subr.bf16.mxu0 0
    %404 = vmatpush1.bf16.msra.mxu0 0
    %405 = vmatprep.subr.bf16.mxu0 0
    %406 = vmatpush1.bf16.msra.mxu0 0
    %407 = vmatprep.subr.bf16.mxu0 0
    %408 = vmatpush1.bf16.msra.mxu0 0
    %409 = vmatprep.subr.bf16.mxu0 0
    %410 = vmatpush1.bf16.msra.mxu0 0
    %411 = vmatprep.subr.bf16.mxu0 0
    %412 = vmatpush1.bf16.msra.mxu0 0
    %413 = vmatprep.subr.bf16.mxu0 0
    %414 = vmatpush1.bf16.msra.mxu0 0
    %415 = vmatprep.subr.bf16.mxu0 0
    %416 = vmatpush1.bf16.msra.mxu0 0
    %417 = vmatprep.subr.bf16.mxu0 0
    %418 = vmatpush1.bf16.msra.mxu0 0
    %419 = vmatprep.subr.bf16.mxu0 0
    %420 = vmatpush1.bf16.msra.mxu0 0
    %421 = vmatprep.subr.bf16.mxu0 0
    %422 = vmatpush1.bf16.msra.mxu0 0
    %423 = vmatprep.subr.bf16.mxu0 0
    %424 = vmatpush1.bf16.msra.mxu0 0
    %425 = vmatprep.subr.bf16.mxu0 0
    %426 = vmatpush1.bf16.msra.mxu0 0
    %427 = vmatprep.subr.bf16.mxu0 0
    %428 = vmatpush1.bf16.msra.mxu0 0
    %429 = vmatprep.mubr.bf16.mxu0 0
    %430 = vmatmul.mubr.bf16.gmra.mrb[0].mxu0 %v395
    %v431 = vpop.f32.mrb[0].mxu0
    %v432 = vadd.f32 0.0, %v431
    %v433 = vpop.f32.mrb[0].mxu0
    %v434 = vpop.f32.mrb[0].mxu0
    %v435 = vpop.f32.mrb[0].mxu0
    %436 = vdwg.mxu0
    %v438 = vrot.slane %v432, 4
    %v440 = vadd.f32 %v213, %v438
    %v441 = vmul.f32 %v440, %v226
    %v442 = vxor.u32 %v441, 2147483648
    %v443 = vmul.f32 %v442, 1.442695
    %v444 = vpow.pop %v443
    %v445 = vadd.f32 %v444, 1.0
    %v446 = vrcp.pop %v445
    %v447 = vmul.f32 1.0, %v446
    %v448 = vmul.f32 %v447, 2.0
    %v449 = vsub.f32 %v448, 1.0
    %v451 = vrot.slane %v382, 6
    %v453 = vmul.f32 %v447, %v451
    %455 = vrot.lane.b32.xlu0 %v449, 64
    %v456 = vpop.permute.xlu0 %455
    %v458 = vmul.f32 %v447, %v456
    %460 = vrot.lane.b32.xlu0 %v458, 32
    %v461 = vpop.permute.xlu0 %460
    %v463 = vadd.f32 %v453, %v461
    %v464 = vtanh.pop %v463
    %466 = vrot.lane.b32.xlu0 %v464, 64
    %v467 = vpop.permute.xlu0 %466
    %v469 = vmul.f32 %v447, %v467
    %v470 = vpack.c.bf16 %v469, %v469
    %v472 = vrot.slane %v470, 2
    %473 = vrot.lane.b32.xlu0 %v472, 32
    %v474 = vpop.permute.xlu0 %473
    %v476 = vsel %vm174, %v474, 0
    %478 = vmatprep.subr.bf16.mxu0 0
    %479 = vmatpush1.bf16.msra.mxu0 %v235
    %480 = vmatprep.subr.bf16.mxu0 0
    %481 = vmatpush1.bf16.msra.mxu0 %v236
    %482 = vmatprep.subr.bf16.mxu0 0
    %483 = vmatpush1.bf16.msra.mxu0 0
    %484 = vmatprep.subr.bf16.mxu0 0
    %485 = vmatpush1.bf16.msra.mxu0 0
    %486 = vmatprep.subr.bf16.mxu0 0
    %487 = vmatpush1.bf16.msra.mxu0 0
    %488 = vmatprep.subr.bf16.mxu0 0
    %489 = vmatpush1.bf16.msra.mxu0 0
    %490 = vmatprep.subr.bf16.mxu0 0
    %491 = vmatpush1.bf16.msra.mxu0 0
    %492 = vmatprep.subr.bf16.mxu0 0
    %493 = vmatpush1.bf16.msra.mxu0 0
    %494 = vmatprep.subr.bf16.mxu0 0
    %495 = vmatpush1.bf16.msra.mxu0 0
    %496 = vmatprep.subr.bf16.mxu0 0
    %497 = vmatpush1.bf16.msra.mxu0 0
    %498 = vmatprep.subr.bf16.mxu0 0
    %499 = vmatpush1.bf16.msra.mxu0 0
    %500 = vmatprep.subr.bf16.mxu0 0
    %501 = vmatpush1.bf16.msra.mxu0 0
    %502 = vmatprep.subr.bf16.mxu0 0
    %503 = vmatpush1.bf16.msra.mxu0 0
    %504 = vmatprep.subr.bf16.mxu0 0
    %505 = vmatpush1.bf16.msra.mxu0 0
    %506 = vmatprep.subr.bf16.mxu0 0
    %507 = vmatpush1.bf16.msra.mxu0 0
    %508 = vmatprep.subr.bf16.mxu0 0
    %509 = vmatpush1.bf16.msra.mxu0 0
    %510 = vmatprep.mubr.bf16.mxu0 0
    %511 = vmatmul.mubr.bf16.gmra.mrb[0].mxu0 %v476
    %v512 = vpop.f32.mrb[0].mxu0
    %v513 = vadd.f32 0.0, %v512
    %v514 = vpop.f32.mrb[0].mxu0
    %v515 = vpop.f32.mrb[0].mxu0
    %v516 = vpop.f32.mrb[0].mxu0
    %517 = vdwg.mxu0
    %v519 = vrot.slane %v513, 2
    %v521 = vadd.f32 %v213, %v519
    %v522 = vmul.f32 %v521, %v226
    %v523 = vxor.u32 %v522, 2147483648
    %v524 = vmul.f32 %v523, 1.442695
    %v525 = vpow.pop %v524
    %v526 = vadd.f32 %v525, 1.0
    %v527 = vrcp.pop %v526
    %v528 = vmul.f32 1.0, %v527
    %v529 = vmul.f32 %v528, 2.0
    %v530 = vsub.f32 %v529, 1.0
    %v532 = vrot.slane %v463, 6
    %v534 = vmul.f32 %v528, %v532
    %536 = vrot.lane.b32.xlu0 %v530, 64
    %v537 = vpop.permute.xlu0 %536
    %v539 = vmul.f32 %v528, %v537
    %541 = vrot.lane.b32.xlu0 %v539, 32
    %v542 = vpop.permute.xlu0 %541
    %v544 = vadd.f32 %v534, %v542
    %v545 = vtanh.pop %v544
    %547 = vrot.lane.b32.xlu0 %v545, 64
    %v548 = vpop.permute.xlu0 %547
    %v550 = vmul.f32 %v528, %v548
    %v551 = vpack.c.bf16 %v550, %v550
    %v553 = vrot.slane %v551, 3
    %554 = vrot.lane.b32.xlu0 %v553, 32
    %v555 = vpop.permute.xlu0 %554
    %v557 = vsel %vm174, %v555, 0
    %559 = vmatprep.subr.bf16.mxu0 0
    %560 = vmatpush1.bf16.msra.mxu0 %v235
    %561 = vmatprep.subr.bf16.mxu0 0
    %562 = vmatpush1.bf16.msra.mxu0 %v236
    %563 = vmatprep.subr.bf16.mxu0 0
    %564 = vmatpush1.bf16.msra.mxu0 0
    %565 = vmatprep.subr.bf16.mxu0 0
    %566 = vmatpush1.bf16.msra.mxu0 0
    %567 = vmatprep.subr.bf16.mxu0 0
    %568 = vmatpush1.bf16.msra.mxu0 0
    %569 = vmatprep.subr.bf16.mxu0 0
    %570 = vmatpush1.bf16.msra.mxu0 0
    %571 = vmatprep.subr.bf16.mxu0 0
    %572 = vmatpush1.bf16.msra.mxu0 0
    %573 = vmatprep.subr.bf16.mxu0 0
    %574 = vmatpush1.bf16.msra.mxu0 0
    %575 = vmatprep.subr.bf16.mxu0 0
    %576 = vmatpush1.bf16.msra.mxu0 0
    %577 = vmatprep.subr.bf16.mxu0 0
    %578 = vmatpush1.bf16.msra.mxu0 0
    %579 = vmatprep.subr.bf16.mxu0 0
    %580 = vmatpush1.bf16.msra.mxu0 0
    %581 = vmatprep.subr.bf16.mxu0 0
    %582 = vmatpush1.bf16.msra.mxu0 0
    %583 = vmatprep.subr.bf16.mxu0 0
    %584 = vmatpush1.bf16.msra.mxu0 0
    %585 = vmatprep.subr.bf16.mxu0 0
    %586 = vmatpush1.bf16.msra.mxu0 0
    %587 = vmatprep.subr.bf16.mxu0 0
    %588 = vmatpush1.bf16.msra.mxu0 0
    %589 = vmatprep.subr.bf16.mxu0 0
    %590 = vmatpush1.bf16.msra.mxu0 0
    %591 = vmatprep.mubr.bf16.mxu0 0
    %592 = vmatmul.mubr.bf16.gmra.mrb[0].mxu0 %v557
    %v593 = vpop.f32.mrb[0].mxu0
    %v594 = vadd.f32 0.0, %v593
    %v595 = vpop.f32.mrb[0].mxu0
    %v596 = vpop.f32.mrb[0].mxu0
    %v597 = vpop.f32.mrb[0].mxu0
    %598 = vdwg.mxu0
    %v599 = vadd.f32 %v216, %v594
    %v600 = vmul.f32 %v599, %v226
    %v601 = vxor.u32 %v600, 2147483648
    %v602 = vmul.f32 %v601, 1.442695
    %v603 = vpow.pop %v602
    %v604 = vadd.f32 %v603, 1.0
    %v605 = vrcp.pop %v604
    %v606 = vmul.f32 1.0, %v605
    %v607 = vmul.f32 %v606, 2.0
    %v608 = vsub.f32 %v607, 1.0
    %v610 = vrot.slane %v544, 6
    %v612 = vmul.f32 %v606, %v610
    %614 = vrot.lane.b32.xlu0 %v608, 64
    %v615 = vpop.permute.xlu0 %614
    %v617 = vmul.f32 %v606, %v615
    %619 = vrot.lane.b32.xlu0 %v617, 32
    %v620 = vpop.permute.xlu0 %619
    %v622 = vadd.f32 %v612, %v620
    %v623 = vtanh.pop %v622
    %625 = vrot.lane.b32.xlu0 %v623, 64
    %v626 = vpop.permute.xlu0 %625
    %v628 = vmul.f32 %v606, %v626
    %v629 = vpack.c.bf16 %v628, %v628
    %631 = vrot.lane.b32.xlu0 %v629, 32
    %v632 = vpop.permute.xlu0 %631
    %v634 = vsel %vm174, %v632, 0
    %636 = vmatprep.subr.bf16.mxu0 0
    %637 = vmatpush1.bf16.msra.mxu0 %v235
    %638 = vmatprep.subr.bf16.mxu0 0
    %639 = vmatpush1.bf16.msra.mxu0 %v236
    %640 = vmatprep.subr.bf16.mxu0 0
    %641 = vmatpush1.bf16.msra.mxu0 0
    %642 = vmatprep.subr.bf16.mxu0 0
    %643 = vmatpush1.bf16.msra.mxu0 0
    %644 = vmatprep.subr.bf16.mxu0 0
    %645 = vmatpush1.bf16.msra.mxu0 0
    %646 = vmatprep.subr.bf16.mxu0 0
    %647 = vmatpush1.bf16.msra.mxu0 0
    %648 = vmatprep.subr.bf16.mxu0 0
    %649 = vmatpush1.bf16.msra.mxu0 0
    %650 = vmatprep.subr.bf16.mxu0 0
    %651 = vmatpush1.bf16.msra.mxu0 0
    %652 = vmatprep.subr.bf16.mxu0 0
    %653 = vmatpush1.bf16.msra.mxu0 0
    %654 = vmatprep.subr.bf16.mxu0 0
    %655 = vmatpush1.bf16.msra.mxu0 0
    %656 = vmatprep.subr.bf16.mxu0 0
    %657 = vmatpush1.bf16.msra.mxu0 0
    %658 = vmatprep.subr.bf16.mxu0 0
    %659 = vmatpush1.bf16.msra.mxu0 0
    %660 = vmatprep.subr.bf16.mxu0 0
    %661 = vmatpush1.bf16.msra.mxu0 0
    %662 = vmatprep.subr.bf16.mxu0 0
    %663 = vmatpush1.bf16.msra.mxu0 0
    %664 = vmatprep.subr.bf16.mxu0 0
    %665 = vmatpush1.bf16.msra.mxu0 0
    %666 = vmatprep.subr.bf16.mxu0 0
    %667 = vmatpush1.bf16.msra.mxu0 0
    %668 = vmatprep.mubr.bf16.mxu0 0
    %669 = vmatmul.mubr.bf16.gmra.mrb[0].mxu0 %v634
    %v670 = vpop.f32.mrb[0].mxu0
    %v671 = vadd.f32 0.0, %v670
    %v672 = vpop.f32.mrb[0].mxu0
    %v673 = vpop.f32.mrb[0].mxu0
    %v674 = vpop.f32.mrb[0].mxu0
    %675 = vdwg.mxu0
    %v677 = vrot.slane %v671, 6
    %v679 = vadd.f32 %v216, %v677
    %v680 = vmul.f32 %v679, %v226
    %v681 = vxor.u32 %v680, 2147483648
    %v682 = vmul.f32 %v681, 1.442695
    %v683 = vpow.pop %v682
    %v684 = vadd.f32 %v683, 1.0
    %v685 = vrcp.pop %v684
    %v686 = vmul.f32 1.0, %v685
    %v687 = vmul.f32 %v686, 2.0
    %v688 = vsub.f32 %v687, 1.0
    %v690 = vrot.slane %v622, 6
    %v692 = vmul.f32 %v686, %v690
    %694 = vrot.lane.b32.xlu0 %v688, 64
    %v695 = vpop.permute.xlu0 %694
    %v697 = vmul.f32 %v686, %v695
    %699 = vrot.lane.b32.xlu0 %v697, 32
    %v700 = vpop.permute.xlu0 %699
    %v702 = vadd.f32 %v692, %v700
    %v703 = vtanh.pop %v702
    %705 = vrot.lane.b32.xlu0 %v703, 64
    %v706 = vpop.permute.xlu0 %705
    %v708 = vmul.f32 %v686, %v706
    %v709 = vpack.c.bf16 %v708, %v708
    %v711 = vrot.slane %v709, 1
    %712 = vrot.lane.b32.xlu0 %v711, 32
    %v713 = vpop.permute.xlu0 %712
    %v715 = vsel %vm174, %v713, 0
    %717 = vmatprep.subr.bf16.mxu0 0
    %718 = vmatpush1.bf16.msra.mxu0 %v235
    %719 = vmatprep.subr.bf16.mxu0 0
    %720 = vmatpush1.bf16.msra.mxu0 %v236
    %721 = vmatprep.subr.bf16.mxu0 0
    %722 = vmatpush1.bf16.msra.mxu0 0
    %723 = vmatprep.subr.bf16.mxu0 0
    %724 = vmatpush1.bf16.msra.mxu0 0
    %725 = vmatprep.subr.bf16.mxu0 0
    %726 = vmatpush1.bf16.msra.mxu0 0
    %727 = vmatprep.subr.bf16.mxu0 0
    %728 = vmatpush1.bf16.msra.mxu0 0
    %729 = vmatprep.subr.bf16.mxu0 0
    %730 = vmatpush1.bf16.msra.mxu0 0
    %731 = vmatprep.subr.bf16.mxu0 0
    %732 = vmatpush1.bf16.msra.mxu0 0
    %733 = vmatprep.subr.bf16.mxu0 0
    %734 = vmatpush1.bf16.msra.mxu0 0
    %735 = vmatprep.subr.bf16.mxu0 0
    %736 = vmatpush1.bf16.msra.mxu0 0
    %737 = vmatprep.subr.bf16.mxu0 0
    %738 = vmatpush1.bf16.msra.mxu0 0
    %739 = vmatprep.subr.bf16.mxu0 0
    %740 = vmatpush1.bf16.msra.mxu0 0
    %741 = vmatprep.subr.bf16.mxu0 0
    %742 = vmatpush1.bf16.msra.mxu0 0
    %743 = vmatprep.subr.bf16.mxu0 0
    %744 = vmatpush1.bf16.msra.mxu0 0
    %745 = vmatprep.subr.bf16.mxu0 0
    %746 = vmatpush1.bf16.msra.mxu0 0
    %747 = vmatprep.subr.bf16.mxu0 0
    %748 = vmatpush1.bf16.msra.mxu0 0
    %749 = vmatprep.mubr.bf16.mxu0 0
    %750 = vmatmul.mubr.bf16.gmra.mrb[0].mxu0 %v715
    %v751 = vpop.f32.mrb[0].mxu0
    %v752 = vadd.f32 0.0, %v751
    %v753 = vpop.f32.mrb[0].mxu0
    %v754 = vpop.f32.mrb[0].mxu0
    %v755 = vpop.f32.mrb[0].mxu0
    %756 = vdwg.mxu0
    %v758 = vrot.slane %v752, 4
    %v760 = vadd.f32 %v216, %v758
    %v761 = vmul.f32 %v760, %v226
    %v762 = vxor.u32 %v761, 2147483648
    %v763 = vmul.f32 %v762, 1.442695
    %v764 = vpow.pop %v763
    %v765 = vadd.f32 %v764, 1.0
    %v766 = vrcp.pop %v765
    %v767 = vmul.f32 1.0, %v766
    %v768 = vmul.f32 %v767, 2.0
    %v769 = vsub.f32 %v768, 1.0
    %v771 = vrot.slane %v702, 6
    %v773 = vmul.f32 %v767, %v771
    %775 = vrot.lane.b32.xlu0 %v769, 64
    %v776 = vpop.permute.xlu0 %775
    %v778 = vmul.f32 %v767, %v776
    %780 = vrot.lane.b32.xlu0 %v778, 32
    %v781 = vpop.permute.xlu0 %780
    %v783 = vadd.f32 %v773, %v781
    %v784 = vtanh.pop %v783
    %786 = vrot.lane.b32.xlu0 %v784, 64
    %v787 = vpop.permute.xlu0 %786
    %v789 = vmul.f32 %v767, %v787
    %v790 = vpack.c.bf16 %v789, %v789
    %v792 = vrot.slane %v790, 2
    %793 = vrot.lane.b32.xlu0 %v792, 32
    %v794 = vpop.permute.xlu0 %793
    %v796 = vsel %vm174, %v794, 0
    %798 = vmatprep.subr.bf16.mxu0 0
    %799 = vmatpush1.bf16.msra.mxu0 %v235
    %800 = vmatprep.subr.bf16.mxu0 0
    %801 = vmatpush1.bf16.msra.mxu0 %v236
    %802 = vmatprep.subr.bf16.mxu0 0
    %803 = vmatpush1.bf16.msra.mxu0 0
    %804 = vmatprep.subr.bf16.mxu0 0
    %805 = vmatpush1.bf16.msra.mxu0 0
    %806 = vmatprep.subr.bf16.mxu0 0
    %807 = vmatpush1.bf16.msra.mxu0 0
    %808 = vmatprep.subr.bf16.mxu0 0
    %809 = vmatpush1.bf16.msra.mxu0 0
    %810 = vmatprep.subr.bf16.mxu0 0
    %811 = vmatpush1.bf16.msra.mxu0 0
    %812 = vmatprep.subr.bf16.mxu0 0
    %813 = vmatpush1.bf16.msra.mxu0 0
    %814 = vmatprep.subr.bf16.mxu0 0
    %815 = vmatpush1.bf16.msra.mxu0 0
    %816 = vmatprep.subr.bf16.mxu0 0
    %817 = vmatpush1.bf16.msra.mxu0 0
    %818 = vmatprep.subr.bf16.mxu0 0
    %819 = vmatpush1.bf16.msra.mxu0 0
    %820 = vmatprep.subr.bf16.mxu0 0
    %821 = vmatpush1.bf16.msra.mxu0 0
    %822 = vmatprep.subr.bf16.mxu0 0
    %823 = vmatpush1.bf16.msra.mxu0 0
    %824 = vmatprep.subr.bf16.mxu0 0
    %825 = vmatpush1.bf16.msra.mxu0 0
    %826 = vmatprep.subr.bf16.mxu0 0
    %827 = vmatpush1.bf16.msra.mxu0 0
    %828 = vmatprep.subr.bf16.mxu0 0
    %829 = vmatpush1.bf16.msra.mxu0 0
    %830 = vmatprep.mubr.bf16.mxu0 0
    %831 = vmatmul.mubr.bf16.gmra.mrb[0].mxu0 %v796
    %v832 = vpop.f32.mrb[0].mxu0
    %v833 = vadd.f32 0.0, %v832
    %v834 = vpop.f32.mrb[0].mxu0
    %v835 = vpop.f32.mrb[0].mxu0
    %v836 = vpop.f32.mrb[0].mxu0
    %837 = vdwg.mxu0
    %v839 = vrot.slane %v833, 2
    %v841 = vadd.f32 %v216, %v839
    %v842 = vmul.f32 %v841, %v226
    %v843 = vxor.u32 %v842, 2147483648
    %v844 = vmul.f32 %v843, 1.442695
    %v845 = vpow.pop %v844
    %v846 = vadd.f32 %v845, 1.0
    %v847 = vrcp.pop %v846
    %v848 = vmul.f32 1.0, %v847
    %v849 = vmul.f32 %v848, 2.0
    %v850 = vsub.f32 %v849, 1.0
    %v852 = vrot.slane %v783, 6
    %v854 = vmul.f32 %v848, %v852
    %856 = vrot.lane.b32.xlu0 %v850, 64
    %v857 = vpop.permute.xlu0 %856
    %v859 = vmul.f32 %v848, %v857
    %861 = vrot.lane.b32.xlu0 %v859, 32
    %v862 = vpop.permute.xlu0 %861
    %v864 = vadd.f32 %v854, %v862
    %v865 = vtanh.pop %v864
    %867 = vrot.lane.b32.xlu0 %v865, 64
    %v868 = vpop.permute.xlu0 %867
    %v870 = vmul.f32 %v848, %v868
    %v871 = vld [vmem:[%s5] sm:$0xff]
    %v872 = vld [vmem:[%s5 + $0x8] sm:$0xff]
    %v873 = vld [vmem:[%s5 + $0x10] sm:$0xff]
    %v874 = vld [vmem:[%s5 + $0x18] sm:$0xff]
    %v875 = vld [vmem:[%s6] sm:$0x1]
    %v877 = vlaneseq
    %v878 = vshrl.u32 %v877, 7
    %v879 = vsub.s32 0, %v878
    %v880 = vrot.slane %v875, %v879
    %v883 = vrot.slane %v870, 6
    %884 = vrot.lane.b32.xlu0 %v883, 32
    %v885 = vpop.permute.xlu0 %884
    %v886 = vsel %vm174, %v885, 0
    %888 = vmatprep.subr.mxu0 0.0
    %889 = vmatpush1.msra.mxu0 %v871
    %890 = vmatprep.subr.mxu0 0.0
    %891 = vmatpush1.msra.mxu0 %v872
    %892 = vmatprep.subr.mxu0 0.0
    %893 = vmatpush1.msra.mxu0 %v873
    %894 = vmatprep.subr.mxu0 0.0
    %895 = vmatpush1.msra.mxu0 %v874
    %896 = vmatprep.subr.mxu0 0.0
    %897 = vmatpush1.msra.mxu0 0.0
    %898 = vmatprep.subr.mxu0 0.0
    %899 = vmatpush1.msra.mxu0 0.0
    %900 = vmatprep.subr.mxu0 0.0
    %901 = vmatpush1.msra.mxu0 0.0
    %902 = vmatprep.subr.mxu0 0.0
    %903 = vmatpush1.msra.mxu0 0.0
    %904 = vmatprep.subr.mxu0 0.0
    %905 = vmatpush1.msra.mxu0 0.0
    %906 = vmatprep.subr.mxu0 0.0
    %907 = vmatpush1.msra.mxu0 0.0
    %908 = vmatprep.subr.mxu0 0.0
    %909 = vmatpush1.msra.mxu0 0.0
    %910 = vmatprep.subr.mxu0 0.0
    %911 = vmatpush1.msra.mxu0 0.0
    %912 = vmatprep.subr.mxu0 0.0
    %913 = vmatpush1.msra.mxu0 0.0
    %914 = vmatprep.subr.mxu0 0.0
    %915 = vmatpush1.msra.mxu0 0.0
    %916 = vmatprep.subr.mxu0 0.0
    %917 = vmatpush1.msra.mxu0 0.0
    %918 = vmatprep.subr.mxu0 0.0
    %919 = vmatpush1.msra.mxu0 0.0
    %920 = vmatprep.subr.mxu0 0.0
    %921 = vmatpush1.msra.mxu0 0.0
    %922 = vmatprep.subr.mxu0 0.0
    %923 = vmatpush1.msra.mxu0 0.0
    %924 = vmatprep.subr.mxu0 0.0
    %925 = vmatpush1.msra.mxu0 0.0
    %926 = vmatprep.subr.mxu0 0.0
    %927 = vmatpush1.msra.mxu0 0.0
    %928 = vmatprep.subr.mxu0 0.0
    %929 = vmatpush1.msra.mxu0 0.0
    %930 = vmatprep.subr.mxu0 0.0
    %931 = vmatpush1.msra.mxu0 0.0
    %932 = vmatprep.subr.mxu0 0.0
    %933 = vmatpush1.msra.mxu0 0.0
    %934 = vmatprep.subr.mxu0 0.0
    %935 = vmatpush1.msra.mxu0 0.0
    %936 = vmatprep.subr.mxu0 0.0
    %937 = vmatpush1.msra.mxu0 0.0
    %938 = vmatprep.subr.mxu0 0.0
    %939 = vmatpush1.msra.mxu0 0.0
    %940 = vmatprep.subr.mxu0 0.0
    %941 = vmatpush1.msra.mxu0 0.0
    %942 = vmatprep.subr.mxu0 0.0
    %943 = vmatpush1.msra.mxu0 0.0
    %944 = vmatprep.subr.mxu0 0.0
    %945 = vmatpush1.msra.mxu0 0.0
    %946 = vmatprep.subr.mxu0 0.0
    %947 = vmatpush1.msra.mxu0 0.0
    %948 = vmatprep.subr.mxu0 0.0
    %949 = vmatpush1.msra.mxu0 0.0
    %950 = vmatprep.subr.mxu0 0.0
    %951 = vmatpush1.msra.mxu0 0.0
    %952 = vmatprep.mubr.f32.mxu0 0.0
    %953 = vmatmul.mubr.f32.gmra.mrb[0].mxu0 %v886
    %v954 = vpop.f32.mrb[0].mxu0
    %v955 = vadd.f32 %v880, %v954
    %v956 = vpop.f32.mrb[0].mxu0
    %957 = vdwg.mxu0
    %vm958 = vcmask 9216
    %959 = vst.msk [vmem:[#allocation2] sm:$0x3] %vm958, %v955
    // Predicated region
    $region30: #{net_forward.1} parent=1 // pred_check
      _
    $region31: #{net_forward.1} parent=1 // pred_check_branch
      %961 = sbr.rel (0) target = $region33
    $region32: #{net_forward.1} parent=1 // pred_region
      %s963 = ssub.s32 32, 32
      %964 = vsyncadd [#allocation3], %s963
      %s966 = sshll.u32 [#allocation2], 4
      %s967 = int_to_ptr.vmem [resolvable:$true] %s966
      %969 = dma.vmem_to_hbm [thread:$0]  %s967, 32, %s7, [#allocation3]
    $region33: #{net_forward.1} parent=1 // pred_fallthru
      _
    // Predicated region
    $region34: #{net_forward.1} parent=1 // pred_check
      _
    $region35: #{net_forward.1} parent=1 // pred_check_branch
      %971 = sbr.rel (0) target = $region37
    $region36: #{net_forward.1} parent=1 // pred_region
      %972 = dma.done [#allocation3], 32
    $region37: #{net_forward.1} parent=1 // pred_fallthru
      _
    %973 = vsyncpa [#allocation3], 1

</llo_original>
